<compile_context>
chip_gen: v5e
topology: v5e:2x2
jax: 0.10.0
libtpu: 0.0.40
codegen_flags: <defaults>
</compile_context>

<pallas_src>
import functools

import jax
import jax.numpy as jnp
from jax.experimental import pallas as pl
from jax.experimental.pallas import tpu as pltpu


def _make_kernel(thinking_idx, beta, epsilon, outer_gamma,
                 original_cw, original_inner_gamma):
    """Kernel closed over all static hyper-parameters.

    Inputs : state_f [cw, tw, inner_gamma] (SMEM f32[3]),
             state_i [count, inner_count]  (SMEM i32[2]),
             labels (VMEM i32[B,1]), y_hat (VMEM [B,C]).
    Outputs: loss (SMEM f32[1]), new state_f (SMEM f32[3]), new state_i (SMEM i32[2]).
    """
    thinking_idx = int(thinking_idx)
    beta = float(beta)
    epsilon = float(epsilon)
    outer_gamma = float(outer_gamma)
    original_cw = float(original_cw)
    original_inner_gamma = float(original_inner_gamma)

    def kernel(state_f_ref, state_i_ref, labels_ref, yhat_ref,
               loss_ref, new_f_ref, new_i_ref):
        y = yhat_ref[...].astype(jnp.float32)                 # (B, C); bf16 input OK
        B, C = y.shape
        labels = labels_ref[...]                              # (B, 1) int32

        # Numerically stable logsumexp; row max reused for the last-row argmax.
        m = jnp.max(y, axis=-1, keepdims=True)                # (B, 1)
        lse = m + jnp.log(jnp.sum(jnp.exp(y - m), axis=-1, keepdims=True))

        lane = jax.lax.broadcasted_iota(jnp.int32, (B, C), 1)

        # Three scalar sums (one per quantity) -> both CE means.
        s_lse = jnp.sum(lse)
        s_cls = jnp.sum(jnp.where(lane == labels, y, 0.0))            # one-hot gather
        s_think = jnp.sum(jnp.where(lane == jnp.int32(thinking_idx), y, 0.0))

        inv_b = jnp.float32(1.0 / B)
        ce_cls = (s_lse - s_cls) * inv_b
        ce_think = (s_lse - s_think) * inv_b

        # Argmax of the last row (first-max tie-break, like torch.argmax).
        last = y[B - 1:B, :]
        argmax_idx = jnp.min(jnp.where(last == m[B - 1:B, :],
                                       lane[B - 1:B, :], jnp.int32(C)))
        flag = argmax_idx == jnp.int32(thinking_idx)

        cw = state_f_ref[0]
        inner_gamma = state_f_ref[2]
        count = state_i_ref[0]
        inner_count = state_i_ref[1]

        # --- Outer state update happens BEFORE the loss (PyTorch order). ---
        # NOTE: cw + min(gamma + cw, 1) can exceed 1 -> tw can go negative;
        # this intentionally matches the PyTorch module.
        new_cw = jnp.where(
            flag,
            cw + jnp.minimum(jnp.float32(outer_gamma) + cw, jnp.float32(1.0)),
            jnp.float32(original_cw))
        new_tw = jnp.float32(1.0) - new_cw
        new_count = jnp.where(flag, count + 1, jnp.int32(0))

        # --- ThinkingReward value uses the CURRENT (pre-update) inner gamma. ---
        thinking_wins = jnp.float32(beta) * inner_gamma * ce_think
        loss = new_cw * ce_cls + new_tw * thinking_wins

        # --- Inner ThinkingReward state update AFTER its value is computed. ---
        new_inner_gamma = jnp.where(
            flag,
            jnp.maximum(inner_gamma - jnp.float32(epsilon), jnp.float32(0.0)),
            jnp.float32(original_inner_gamma))
        new_inner_count = jnp.where(flag, inner_count + 1, jnp.int32(0))

        loss_ref[0] = loss
        new_f_ref[0] = new_cw
        new_f_ref[1] = new_tw
        new_f_ref[2] = new_inner_gamma
        new_i_ref[0] = new_count
        new_i_ref[1] = new_inner_count

    return kernel


@functools.partial(
    jax.jit,
    static_argnames=("thinking_idx", "beta", "epsilon", "outer_gamma",
                     "original_cw", "original_inner_gamma"))
def _weighted_step(state_f, state_i, labels, y_hat, *,
                   thinking_idx, beta, epsilon, outer_gamma,
                   original_cw, original_inner_gamma):
    """One forward step: a single pallas_call; all state stays on device."""
    B, C = y_hat.shape
    labels2 = labels.reshape(B, 1)                            # layout only, inside jit
    kernel = _make_kernel(thinking_idx, beta, epsilon, outer_gamma,
                          original_cw, original_inner_gamma)
    loss, new_f, new_i = pl.pallas_call(
        kernel,
        out_shape=(jax.ShapeDtypeStruct((1,), jnp.float32),   # loss
                   jax.ShapeDtypeStruct((3,), jnp.float32),   # [cw, tw, inner_gamma]
                   jax.ShapeDtypeStruct((2,), jnp.int32)),    # [count, inner_count]
        in_specs=[
            pl.BlockSpec(memory_space=pltpu.MemorySpace.SMEM),   # state_f f32[3]
            pl.BlockSpec(memory_space=pltpu.MemorySpace.SMEM),   # state_i i32[2]
            pl.BlockSpec(memory_space=pltpu.MemorySpace.VMEM),   # labels (B, 1) int32
            pl.BlockSpec(memory_space=pltpu.MemorySpace.VMEM),   # y_hat  (B, C)
        ],
        out_specs=(
            pl.BlockSpec(memory_space=pltpu.MemorySpace.SMEM),
            pl.BlockSpec(memory_space=pltpu.MemorySpace.SMEM),
            pl.BlockSpec(memory_space=pltpu.MemorySpace.SMEM),
        ),
        # state-in aliased to state-out: no fresh tiny buffers per step
        input_output_aliases={0: 1, 1: 2},
        cost_estimate=pl.CostEstimate(
            flops=10 * B * C,
            transcendentals=B * C + B,
            bytes_accessed=B * C * y_hat.dtype.itemsize + B * 4 + 40),
    )(state_f, state_i, labels2, y_hat)
    return loss, new_f, new_i


class WeightedClassificationThinkingRewardLoss:
    """Python wrapper mirroring the nn.Module.

    All mutable attributes (classification_weight, thinking_weight, counts, the inner
    ThinkingReward gamma/count) live in two packed DEVICE arrays and are updated inside
    the Pallas kernel — no host sync and no trailing XLA fusion per call.
    """

    def __init__(self, gamma, beta, epsilon, num_classes,
                 classification_weight, thinking_weight=1.0, device=None):
        del thinking_weight, device                   # unused, as in the PyTorch module
        self.gamma = float(gamma)                     # outer gamma (never mutated)
        self.beta = float(beta)
        self.epsilon = float(epsilon)
        self.thinking_class_index = int(num_classes)
        self.original_classification_weight = float(classification_weight)
        cw0 = float(classification_weight)
        # Packed device-resident mutable state:
        #   _state_f = [classification_weight, thinking_weight, inner_gamma]
        #   _state_i = [outer_count, inner_count]
        self._state_f = jnp.array([cw0, 1.0 - cw0, float(gamma)], jnp.float32)
        self._state_i = jnp.zeros((2,), jnp.int32)

    # Read-only views of the packed device state (mirror the nn.Module attributes).
    @property
    def classification_weight(self):
        return self._state_f[0]

    @property
    def thinking_weight(self):
        return self._state_f[1]

    @property
    def count(self):
        return self._state_i[0]

    def forward(self, y_hat, y):
        y = jnp.asarray(y)
        if y.dtype != jnp.int32:       # skip the convert when labels are already int32
            y = y.astype(jnp.int32)
        loss, self._state_f, self._state_i = _weighted_step(
            self._state_f, self._state_i, y, y_hat,
            thinking_idx=self.thinking_class_index,
            beta=self.beta, epsilon=self.epsilon,
            outer_gamma=self.gamma,
            original_cw=self.original_classification_weight,
            original_inner_gamma=self.gamma)
        # loss is a shape-(1,) device scalar; returned as-is to avoid an extra
        # per-call dispatch for a squeeze.
        return loss

    __call__ = forward


if __name__ == "__main__":
    key = jax.random.PRNGKey(0)
    k1, k2, k3 = jax.random.split(key, 3)

    batch = 8
    num_classes = 15                       # thinking class index = 15
    n_logits = num_classes + 1             # y_hat has num_classes + 1 columns

    gamma, beta, epsilon = 0.5, 2.0, 0.1
    cw0 = 0.7

    y_hat1 = jax.random.normal(k1, (batch, n_logits), dtype=jnp.float32)
    y_hat2 = jax.random.normal(k2, (batch, n_logits), dtype=jnp.float32)
    # Force the flag=True branch on step 2 (last row argmax == thinking class).
    y_hat2 = y_hat2.at[-1, num_classes].set(10.0)
    y = jax.random.randint(k3, (batch,), 0, num_classes)

    mod = WeightedClassificationThinkingRewardLoss(
        gamma=gamma, beta=beta, epsilon=epsilon, num_classes=num_classes,
        classification_weight=cw0)

    loss1 = mod(y_hat1, y)                 # exercises trace + kernel (flag likely False)
    loss2 = mod(y_hat2, y)                 # cached jit + state carry (flag forced True)
    loss1, loss2 = jax.block_until_ready((loss1, loss2))

    # ---- pure-JAX reference replicating the stateful PyTorch forward ----
    def reference_seq(y_hats, labels):
        thinking_idx = num_classes
        cw, inner_g = cw0, gamma
        out = []
        for yh in y_hats:
            lp = jax.nn.log_softmax(yh.astype(jnp.float32), axis=-1)
            ce_cls = -jnp.mean(lp[jnp.arange(yh.shape[0]), labels])
            ce_think = -jnp.mean(lp[:, thinking_idx])
            flag = bool(jnp.argmax(yh[-1]) == thinking_idx)   # host sync OK in test
            if flag:
                cw = cw + min(gamma + cw, 1.0)
            else:
                cw = cw0
            tw = 1.0 - cw
            out.append(cw * ce_cls + tw * (beta * inner_g * ce_think))
            if flag:
                inner_g = max(inner_g - epsilon, 0.0)
            else:
                inner_g = gamma
        return out

    ref1, ref2 = reference_seq([y_hat1, y_hat2], y)
    assert jnp.allclose(loss1, ref1, rtol=1e-5, atol=1e-5), (loss1, ref1)
    assert jnp.allclose(loss2, ref2, rtol=1e-5, atol=1e-5), (loss2, ref2)

    print("KERNEL_OK")
</pallas_src>

<mosaic_0001>
module attributes {stable_mosaic.version = 11 : i64} {
  func.func @kernel(%arg0: memref<3xf32, #tpu.memory_space<smem>>, %arg1: memref<2xi32, #tpu.memory_space<smem>>, %arg2: memref<8x1xi32, #tpu.memory_space<vmem>>, %arg3: memref<8x16xf32, #tpu.memory_space<vmem>>, %arg4: memref<1xf32, #tpu.memory_space<smem>>, %arg5: memref<3xf32, #tpu.memory_space<smem>>, %arg6: memref<2xi32, #tpu.memory_space<smem>>) attributes {dimension_semantics = [], scalar_prefetch = 0 : i64, scratch_operands = 0 : i64, tpu.core_type = #tpu.core_type<tc>} {
    %c0 = arith.constant 0 : index
    %c0_0 = arith.constant 0 : index
    %0 = vector.load %arg3[%c0, %c0_0] : memref<8x16xf32, #tpu.memory_space<vmem>>, vector<8x16xf32>
    %c0_1 = arith.constant 0 : index
    %c0_2 = arith.constant 0 : index
    %1 = vector.load %arg2[%c0_1, %c0_2] : memref<8x1xi32, #tpu.memory_space<vmem>>, vector<8x1xi32>
    %cst = arith.constant dense<0xFF800000> : vector<8xf32>
    %2 = vector.multi_reduction <maximumf>, %0, %cst [1] : vector<8x16xf32> to vector<8xf32>
    %3 = vector.shape_cast %2 : vector<8xf32> to vector<8x1xf32>
    %4 = vector.broadcast %3 : vector<8x1xf32> to vector<8x16xf32>
    %5 = arith.subf %0, %4 : vector<8x16xf32>
    %6 = math.exp %5 : vector<8x16xf32>
    %cst_3 = arith.constant dense<0.000000e+00> : vector<8xf32>
    %7 = vector.multi_reduction <add>, %6, %cst_3 [1] : vector<8x16xf32> to vector<8xf32>
    %8 = vector.shape_cast %7 : vector<8xf32> to vector<8x1xf32>
    %9 = math.log %8 : vector<8x1xf32>
    %10 = arith.addf %3, %9 : vector<8x1xf32>
    %11 = tpu.iota {dimensions = array<i32: 1>} : vector<8x16xi32>
    %12 = vector.shape_cast %10 : vector<8x1xf32> to vector<1x8x1xf32>
    %cst_4 = arith.constant dense<0.000000e+00> : vector<1xf32>
    %13 = vector.multi_reduction <add>, %12, %cst_4 [1, 2] : vector<1x8x1xf32> to vector<1xf32>
    %14 = vector.shape_cast %13 : vector<1xf32> to vector<1x1x1xf32>
    %15 = vector.extract %14[0, 0, 0] : f32 from vector<1x1x1xf32>
    %16 = vector.broadcast %1 : vector<8x1xi32> to vector<8x16xi32>
    %17 = arith.cmpi eq, %11, %16 : vector<8x16xi32>
    %cst_5 = arith.constant 0.000000e+00 : f32
    %18 = vector.broadcast %cst_5 : f32 to vector<8x16xf32>
    %19 = arith.select %17, %0, %18 : vector<8x16xi1>, vector<8x16xf32>
    %20 = vector.shape_cast %19 : vector<8x16xf32> to vector<1x8x16xf32>
    %cst_6 = arith.constant dense<0.000000e+00> : vector<1xf32>
    %21 = vector.multi_reduction <add>, %20, %cst_6 [1, 2] : vector<1x8x16xf32> to vector<1xf32>
    %22 = vector.shape_cast %21 : vector<1xf32> to vector<1x1x1xf32>
    %23 = vector.extract %22[0, 0, 0] : f32 from vector<1x1x1xf32>
    %c15_i32 = arith.constant 15 : i32
    %24 = vector.broadcast %c15_i32 : i32 to vector<8x16xi32>
    %25 = arith.cmpi eq, %11, %24 : vector<8x16xi32>
    %cst_7 = arith.constant 0.000000e+00 : f32
    %26 = vector.broadcast %cst_7 : f32 to vector<8x16xf32>
    %27 = arith.select %25, %0, %26 : vector<8x16xi1>, vector<8x16xf32>
    %28 = vector.shape_cast %27 : vector<8x16xf32> to vector<1x8x16xf32>
    %cst_8 = arith.constant dense<0.000000e+00> : vector<1xf32>
    %29 = vector.multi_reduction <add>, %28, %cst_8 [1, 2] : vector<1x8x16xf32> to vector<1xf32>
    %30 = vector.shape_cast %29 : vector<1xf32> to vector<1x1x1xf32>
    %31 = vector.extract %30[0, 0, 0] : f32 from vector<1x1x1xf32>
    %32 = arith.subf %15, %23 : f32
    %cst_9 = arith.constant 1.250000e-01 : f32
    %33 = arith.mulf %32, %cst_9 : f32
    %34 = arith.subf %15, %31 : f32
    %cst_10 = arith.constant 1.250000e-01 : f32
    %35 = arith.mulf %34, %cst_10 : f32
    %36 = vector.extract_strided_slice %0 {offsets = [7, 0], sizes = [1, 16], strides = [1, 1]} : vector<8x16xf32> to vector<1x16xf32>
    %37 = vector.extract_strided_slice %3 {offsets = [7, 0], sizes = [1, 1], strides = [1, 1]} : vector<8x1xf32> to vector<1x1xf32>
    %38 = vector.broadcast %37 : vector<1x1xf32> to vector<1x16xf32>
    %39 = arith.cmpf oeq, %36, %38 : vector<1x16xf32>
    %40 = vector.extract_strided_slice %11 {offsets = [7, 0], sizes = [1, 16], strides = [1, 1]} : vector<8x16xi32> to vector<1x16xi32>
    %c16_i32 = arith.constant 16 : i32
    %41 = vector.broadcast %c16_i32 : i32 to vector<1x16xi32>
    %42 = arith.select %39, %40, %41 : vector<1x16xi1>, vector<1x16xi32>
    %43 = vector.shape_cast %42 : vector<1x16xi32> to vector<1x1x16xi32>
    %cst_11 = arith.constant dense<2147483647> : vector<1xi32>
    %44 = vector.multi_reduction <minsi>, %43, %cst_11 [1, 2] : vector<1x1x16xi32> to vector<1xi32>
    %45 = vector.shape_cast %44 : vector<1xi32> to vector<1x1x1xi32>
    %46 = vector.extract %45[0, 0, 0] : i32 from vector<1x1x1xi32>
    %c15_i32_12 = arith.constant 15 : i32
    %47 = arith.cmpi eq, %46, %c15_i32_12 : i32
    %c0_13 = arith.constant 0 : index
    %48 = memref.load %arg0[%c0_13] : memref<3xf32, #tpu.memory_space<smem>>
    %c2 = arith.constant 2 : index
    %49 = memref.load %arg0[%c2] : memref<3xf32, #tpu.memory_space<smem>>
    %c0_14 = arith.constant 0 : index
    %50 = memref.load %arg1[%c0_14] : memref<2xi32, #tpu.memory_space<smem>>
    %c1 = arith.constant 1 : index
    %51 = memref.load %arg1[%c1] : memref<2xi32, #tpu.memory_space<smem>>
    %cst_15 = arith.constant 5.000000e-01 : f32
    %52 = arith.addf %cst_15, %48 : f32
    %cst_16 = arith.constant 1.000000e+00 : f32
    %53 = arith.minimumf %52, %cst_16 : f32
    %54 = arith.addf %48, %53 : f32
    %cst_17 = arith.constant 0.699999988 : f32
    %55 = arith.select %47, %54, %cst_17 : f32
    %cst_18 = arith.constant 1.000000e+00 : f32
    %56 = arith.subf %cst_18, %55 : f32
    %c1_i32 = arith.constant 1 : i32
    %57 = arith.addi %50, %c1_i32 : i32
    %c0_i32 = arith.constant 0 : i32
    %58 = arith.select %47, %57, %c0_i32 : i32
    %cst_19 = arith.constant 2.000000e+00 : f32
    %59 = arith.mulf %cst_19, %49 : f32
    %60 = arith.mulf %59, %35 : f32
    %61 = arith.mulf %55, %33 : f32
    %62 = arith.mulf %56, %60 : f32
    %63 = arith.addf %61, %62 : f32
    %cst_20 = arith.constant 1.000000e-01 : f32
    %64 = arith.subf %49, %cst_20 : f32
    %cst_21 = arith.constant 0.000000e+00 : f32
    %65 = arith.maximumf %64, %cst_21 : f32
    %cst_22 = arith.constant 5.000000e-01 : f32
    %66 = arith.select %47, %65, %cst_22 : f32
    %c1_i32_23 = arith.constant 1 : i32
    %67 = arith.addi %51, %c1_i32_23 : i32
    %c0_i32_24 = arith.constant 0 : i32
    %68 = arith.select %47, %67, %c0_i32_24 : i32
    %c0_25 = arith.constant 0 : index
    %69 = memref.load %arg4[%c0_25] : memref<1xf32, #tpu.memory_space<smem>>
    memref.store %63, %arg4[%c0_25] : memref<1xf32, #tpu.memory_space<smem>>
    %c0_26 = arith.constant 0 : index
    %70 = memref.load %arg5[%c0_26] : memref<3xf32, #tpu.memory_space<smem>>
    memref.store %55, %arg5[%c0_26] : memref<3xf32, #tpu.memory_space<smem>>
    %c1_27 = arith.constant 1 : index
    %71 = memref.load %arg5[%c1_27] : memref<3xf32, #tpu.memory_space<smem>>
    memref.store %56, %arg5[%c1_27] : memref<3xf32, #tpu.memory_space<smem>>
    %c2_28 = arith.constant 2 : index
    %72 = memref.load %arg5[%c2_28] : memref<3xf32, #tpu.memory_space<smem>>
    memref.store %66, %arg5[%c2_28] : memref<3xf32, #tpu.memory_space<smem>>
    %c0_29 = arith.constant 0 : index
    %73 = memref.load %arg6[%c0_29] : memref<2xi32, #tpu.memory_space<smem>>
    memref.store %58, %arg6[%c0_29] : memref<2xi32, #tpu.memory_space<smem>>
    %c1_30 = arith.constant 1 : index
    %74 = memref.load %arg6[%c1_30] : memref<2xi32, #tpu.memory_space<smem>>
    memref.store %68, %arg6[%c1_30] : memref<2xi32, #tpu.memory_space<smem>>
    return
  }
}

</mosaic_0001>

<llo_original>
// kernel: _weighted_step.1
$region0: #{_weighted_step.1}
  #allocation0 [shape = 'u32[]', space=smem, size = 0x4, offset = 0x4, fixed_abs, tag = 'smem constant byte address 0x4 - core index']
  #allocation1 [shape = 'u32[72,128]{1,0:T(1,128)}', space=vmem, size = 0x9000, scoped, tag = 'internal scratch']
  %s0 = inlined_call_operand.hbm [shape: f32[3], index: 0, kind: input, shape index: {}, may-alias: {0,5}]
  %s1 = inlined_call_operand.hbm [shape: s32[2], index: 1, kind: input, shape index: {}, may-alias: {1,6}]
  %s2 = inlined_call_operand.vmem [shape: s32[8,1], index: 2, kind: input, shape index: {}]
  %s3 = inlined_call_operand.vmem [shape: f32[8,16], index: 3, kind: input, shape index: {}]
  %s4 = inlined_call_operand.hbm [shape: f32[1], index: 4, kind: output, shape index: {0}]
  %s5 = inlined_call_operand.hbm [shape: f32[3], index: 5, kind: output, shape index: {1}, may-alias: {0,5}]
  %s6 = inlined_call_operand.hbm [shape: s32[2], index: 6, kind: output, shape index: {2}, may-alias: {1,6}]
  %7 = xla_tuple %s4, %s5, %s6
  %s8 = sld [smem:[#allocation0]]
  $region50: #{_weighted_step.1} parent=0
    _
  %s10 = ssub.s32 1, %s8
  %s11 = scalar_select 0, %s10, %s8
  $region1: #{_weighted_step.1} parent=0
    #allocation2 [shape = 'u8[512]{0}', space=smem, size = 0x200, scoped, tag = 'input window, operand 0, single buffered']
    #allocation3 [shape = 's32[1]{0}', space=sflag, size = 0x4, scoped, tag = 'scoped memory for _weighted_step.1']
    #allocation4 [shape = 's32[1]{0}', space=sflag, size = 0x4, scoped, tag = 'scoped memory for _weighted_step.1']
    #allocation5 [shape = 'u8[512]{0}', space=smem, size = 0x200, scoped, tag = 'input window, operand 1, single buffered']
    #allocation6 [shape = 's32[1]{0}', space=sflag, size = 0x4, scoped, tag = 'scoped memory for _weighted_step.1']
    #allocation7 [shape = 'u8[512]{0}', space=smem, size = 0x200, scoped, tag = 'output window, operand 0, single buffered']
    #allocation8 [shape = 'u8[512]{0}', space=smem, size = 0x200, scoped, tag = 'output window, operand 1, single buffered']
    #allocation9 [shape = 's32[1]{0}', space=sflag, size = 0x4, scoped, tag = 'scoped memory for _weighted_step.1']
    #allocation10 [shape = 'u8[512]{0}', space=smem, size = 0x200, scoped, tag = 'output window, operand 2, single buffered']
    %12 = vsyncpa [#allocation3], 0
    %13 = vsyncpa [#allocation6], 0
    %14 = vsyncpa [#allocation4], 0
    %15 = vsyncpa [#allocation9], 0
    // Predicated region
    $region2: #{_weighted_step.1} parent=1 // pred_check
      _
    $region3: #{_weighted_step.1} parent=1 // pred_check_branch
      %17 = sbr.rel (0) target = $region5
    $region4: #{_weighted_step.1} parent=1 // pred_region
      %19 = vsyncadd [#allocation3], 0
      %s21 = sshll.u32 %s0, 4
      %s22 = int_to_ptr.hbm [resolvable:$true] %s21
      %24 = dma.hbm_to_smem %s22, 16, [#allocation2], [#allocation3]
    $region5: #{_weighted_step.1} parent=1 // pred_fallthru
      _
    // Predicated region
    $region6: #{_weighted_step.1} parent=1 // pred_check
      _
    $region7: #{_weighted_step.1} parent=1 // pred_check_branch
      %26 = sbr.rel (0) target = $region9
    $region8: #{_weighted_step.1} parent=1 // pred_region
      %28 = vsyncadd [#allocation6], 0
      %s30 = sshll.u32 %s1, 4
      %s31 = int_to_ptr.hbm [resolvable:$true] %s30
      %33 = dma.hbm_to_smem %s31, 16, [#allocation5], [#allocation6]
    $region9: #{_weighted_step.1} parent=1 // pred_fallthru
      _
    // Predicated region
    $region10: #{_weighted_step.1} parent=1 // pred_check
      _
    $region11: #{_weighted_step.1} parent=1 // pred_check_branch
      %35 = sbr.rel (0) target = $region13
    $region12: #{_weighted_step.1} parent=1 // pred_region
      _
    $region13: #{_weighted_step.1} parent=1 // pred_fallthru
      _
    // Predicated region
    $region14: #{_weighted_step.1} parent=1 // pred_check
      _
    $region15: #{_weighted_step.1} parent=1 // pred_check_branch
      %37 = sbr.rel (0) target = $region17
    $region16: #{_weighted_step.1} parent=1 // pred_region
      _
    $region17: #{_weighted_step.1} parent=1 // pred_fallthru
      _
    // Predicated region
    $region18: #{_weighted_step.1} parent=1 // pred_check
      _
    $region19: #{_weighted_step.1} parent=1 // pred_check_branch
      %39 = sbr.rel (0) target = $region21
    $region20: #{_weighted_step.1} parent=1 // pred_region
      %41 = dma.done [#allocation3], 16
    $region21: #{_weighted_step.1} parent=1 // pred_fallthru
      _
    // Predicated region
    $region22: #{_weighted_step.1} parent=1 // pred_check
      _
    $region23: #{_weighted_step.1} parent=1 // pred_check_branch
      %43 = sbr.rel (0) target = $region25
    $region24: #{_weighted_step.1} parent=1 // pred_region
      %45 = dma.done [#allocation6], 16
    $region25: #{_weighted_step.1} parent=1 // pred_fallthru
      _
    %46 = sfence
    %v47 = vld [vmem:[%s3] sm:$0xff]
    %v48 = vld [vmem:[%s2] sm:$0xff]
    %vm49 = vcmask 130048
    %v50 = vsel %vm49, %v47, -inf
    %51 = vmax.xlane.f32.xlu0 %v50
    %v52 = vpop.xlane.xlu0 %51
    %v53 = vsub.f32 %v47, %v52
    %v54 = vmul.f32 %v53, 1.442695
    %v55 = vpow.pop %v54
    %v56 = vsel %vm49, %v55, 0.0
    %57 = vadd.xlane.f32.xlu0 %v56
    %v58 = vpop.xlane.xlu0 %57
    %v59 = vlog2.pop %v58
    %v60 = vmul.f32 %v59, 0.6931472
    %v61 = vadd.f32 %v52, %v60
    %v62 = vlaneseq
    %v63 = vand.u32 %v62, 127
    %vm64 = vcmask 7168
    %v65 = vsel %vm64, %v61, 0.0
    %66 = vadd.xlane.f32.xlu0 %v65
    %v67 = vpop.xlane.xlu0 %66
    %v68 = vrot.slane %v67, 4
    %v69 = vadd.f32 %v67, %v68
    %v70 = vrot.slane %v69, 2
    %v71 = vadd.f32 %v69, %v70
    %v72 = vrot.slane %v71, 1
    %v73 = vadd.f32 %v71, %v72
    %s74 = vtos %v73
    %75 = vset.pattern.permute.xlu0 0
    %76 = vperm.xlu0 %75, %v48
    %v77 = vpop.permute.xlu0 %76
    %vm78 = vcmp.eq.s32.totalorder %v63, %v77
    %v79 = vsel %vm78, %v47, 0.0
    %v80 = vsel %vm49, %v79, 0.0
    %81 = vadd.xlane.f32.xlu0 %v80
    %v82 = vpop.xlane.xlu0 %81
    %v83 = vrot.slane %v82, 4
    %v84 = vadd.f32 %v82, %v83
    %v85 = vrot.slane %v84, 2
    %v86 = vadd.f32 %v84, %v85
    %v87 = vrot.slane %v86, 1
    %v88 = vadd.f32 %v86, %v87
    %s89 = vtos %v88
    %vm90 = vcmp.eq.s32.totalorder %v63, 15
    %v91 = vsel %vm90, %v47, 0.0
    %v92 = vsel %vm49, %v91, 0.0
    %93 = vadd.xlane.f32.xlu0 %v92
    %v94 = vpop.xlane.xlu0 %93
    %v95 = vrot.slane %v94, 4
    %v96 = vadd.f32 %v94, %v95
    %v97 = vrot.slane %v96, 2
    %v98 = vadd.f32 %v96, %v97
    %v99 = vrot.slane %v98, 1
    %v100 = vadd.f32 %v98, %v99
    %s101 = vtos %v100
    %s102 = ssub.f32 %s74, %s89
    %s103 = smul.f32 %s102, 0.125
    %s104 = ssub.f32 %s74, %s101
    %s105 = smul.f32 %s104, 0.125
    %vm106 = vcmp.eq.f32.partialorder %v47, %v52
    %v107 = vsel %vm106, %v63, 16
    %vm108 = vcmask 130055
    %v109 = vsel %vm108, %v107, 2147483647
    %v110 = vand.u32 %v109, 65535
    %v111 = vshra.s32 %v109, 16
    %v112 = vcvt.s32.f32 %v110
    %v113 = vcvt.s32.f32 %v111
    %114 = vmin.xlane.f32.xlu0 %v113
    %v115 = vpop.xlane.xlu0 %114
    %vm116 = vcmp.eq.f32.partialorder %v113, %v115
    %v117 = vsel %vm116, %v112, inf
    %118 = vmin.xlane.f32.xlu0 %v117
    %v119 = vpop.xlane.xlu0 %118
    %v120 = vcvt.f32.s32 %v119
    %v121 = vcvt.f32.s32 %v115
    %v122 = vshll.u32 %v121, 16
    %v123 = vadd.s32 %v122, %v120
    %v124 = vrot.slane %v123, 4
    %vm125 = vcmp.lt.s32.totalorder %v123, %v124
    %v126 = vsel %vm125, %v123, %v124
    %v127 = vrot.slane %v126, 2
    %vm128 = vcmp.lt.s32.totalorder %v126, %v127
    %v129 = vsel %vm128, %v126, %v127
    %v130 = vrot.slane %v129, 1
    %vm131 = vcmp.lt.s32.totalorder %v129, %v130
    %v132 = vsel %vm131, %v129, %v130
    %s133 = vtos %v132
    %p134 = scmp.eq.s32.totalorder %s133, 15
    %s135 = sld [smem:[#allocation2]]
    %s136 = sld [smem:[#allocation2 + $0x2]]
    %s137 = sld [smem:[#allocation5]]
    %s138 = sld [smem:[#allocation5 + $0x1]]
    %s139 = sadd.f32 %s135, 0.5
    %s140 = smin.f32 %s139, 1.0
    %s141 = sadd.f32 %s135, %s140
    %s142 = scalar_select %p134, %s141, 0.7
    %s143 = ssub.f32 1.0, %s142
    %s144 = sadd.s32 %s137, 1
    %s145 = scalar_select %p134, %s144, 0
    %s146 = smul.f32 %s136, 2.0
    %s147 = smul.f32 %s146, %s105
    %s148 = smul.f32 %s142, %s103
    %s149 = smul.f32 %s143, %s147
    %s150 = sadd.f32 %s148, %s149
    %s151 = ssub.f32 %s136, 0.1
    %s152 = smax.f32 %s151, 0.0
    %s153 = scalar_select %p134, %s152, 0.5
    %s154 = sadd.s32 %s138, 1
    %s155 = scalar_select %p134, %s154, 0
    %s156 = scalar_lea.smem [#allocation7], 0
    %157 = sst [smem:[%s156]] %s150
    %s158 = scalar_lea.smem [#allocation8], 0
    %159 = sst [smem:[%s158]] %s142
    %s160 = scalar_lea.smem [#allocation8], 1
    %161 = sst [smem:[%s160]] %s143
    %s162 = scalar_lea.smem [#allocation8], 2
    %163 = sst [smem:[%s162]] %s153
    %s164 = scalar_lea.smem [#allocation10], 0
    %165 = sst [smem:[%s164]] %s145
    %s166 = scalar_lea.smem [#allocation10], 1
    %167 = sst [smem:[%s166]] %s155
    // Predicated region
    $region26: #{_weighted_step.1} parent=1 // pred_check
      _
    $region27: #{_weighted_step.1} parent=1 // pred_check_branch
      %169 = sbr.rel (0) target = $region29
    $region28: #{_weighted_step.1} parent=1 // pred_region
      %171 = vsyncadd [#allocation4], 0
      %s173 = sshll.u32 %s4, 4
      %s174 = int_to_ptr.hbm [resolvable:$true] %s173
      %176 = dma.smem_to_hbm [#allocation7], 16, %s174, [#allocation4]
    $region29: #{_weighted_step.1} parent=1 // pred_fallthru
      _
    // Predicated region
    $region30: #{_weighted_step.1} parent=1 // pred_check
      _
    $region31: #{_weighted_step.1} parent=1 // pred_check_branch
      %178 = sbr.rel (0) target = $region33
    $region32: #{_weighted_step.1} parent=1 // pred_region
      %180 = vsyncadd [#allocation9], 0
      %s182 = sshll.u32 %s5, 4
      %s183 = int_to_ptr.hbm [resolvable:$true] %s182
      %185 = dma.smem_to_hbm [#allocation8], 16, %s183, [#allocation9]
    $region33: #{_weighted_step.1} parent=1 // pred_fallthru
      _
    // Predicated region
    $region34: #{_weighted_step.1} parent=1 // pred_check
      _
    $region35: #{_weighted_step.1} parent=1 // pred_check_branch
      %187 = sbr.rel (0) target = $region37
    $region36: #{_weighted_step.1} parent=1 // pred_region
      %189 = vsyncadd [#allocation9], 0
      %s191 = sshll.u32 %s6, 4
      %s192 = int_to_ptr.hbm [resolvable:$true] %s191
      %194 = dma.smem_to_hbm [#allocation10], 16, %s192, [#allocation9]
    $region37: #{_weighted_step.1} parent=1 // pred_fallthru
      _
    // Predicated region
    $region38: #{_weighted_step.1} parent=1 // pred_check
      _
    $region39: #{_weighted_step.1} parent=1 // pred_check_branch
      %196 = sbr.rel (0) target = $region41
    $region40: #{_weighted_step.1} parent=1 // pred_region
      %198 = dma.done [#allocation4], 16
    $region41: #{_weighted_step.1} parent=1 // pred_fallthru
      _
    // Predicated region
    $region42: #{_weighted_step.1} parent=1 // pred_check
      _
    $region43: #{_weighted_step.1} parent=1 // pred_check_branch
      %200 = sbr.rel (0) target = $region45
    $region44: #{_weighted_step.1} parent=1 // pred_region
      %202 = dma.done [#allocation9], 16
    $region45: #{_weighted_step.1} parent=1 // pred_fallthru
      _
    // Predicated region
    $region46: #{_weighted_step.1} parent=1 // pred_check
      _
    $region47: #{_weighted_step.1} parent=1 // pred_check_branch
      %204 = sbr.rel (0) target = $region49
    $region48: #{_weighted_step.1} parent=1 // pred_region
      %206 = dma.done [#allocation9], 16
    $region49: #{_weighted_step.1} parent=1 // pred_fallthru
      _
    %207 = sfence
    %208 = vsyncpa [#allocation3], 1
    %209 = vsyncpa [#allocation6], 1
    %210 = vsyncpa [#allocation4], 1
    %211 = vsyncpa [#allocation9], 1

</llo_original>
